<compile_context>
chip_gen: v5e
topology: v5e:2x2
jax: 0.10.0
libtpu: 0.0.40
codegen_flags: <defaults>
</compile_context>

<pallas_src>
import jax
import jax.numpy as jnp
import numpy as np
from jax import lax
from jax.experimental import pallas as pl
from jax.experimental.pallas import tpu as pltpu

N = 128       # number of cells in the point cloud
D = 32        # feature dimension
K = 8         # mixture centers
STATES = 2    # classifier states
DEGREE = 2    # polynomial degree (fixed default in Polynomial)


def _density_classifier_kernel(x_ref, p_ref, out_ref):
    n, d_dim = x_ref.shape                     # (N, D) — static
    s = out_ref.shape[1]                       # STATES

    x = x_ref[...].astype(jnp.float32)         # (N, D); cast is a no-op for f32,
                                               # guards a future bf16-DMA variant (v5e)

    # Packed parameter slab (K, D + 1 + 3*STATES), sliced statically.
    mu = p_ref[:, 0:d_dim]                                     # (K, D)
    nm2 = p_ref[:, d_dim:d_dim + 1]                            # (K, 1)  -0.5||mu_k||^2
    a1 = p_ref[:, d_dim + 1:d_dim + 1 + s]                     # (K, STATES), col 0 = 0
    a2 = p_ref[:, d_dim + 1 + s:d_dim + 1 + 2 * s]             # (K, STATES), col 0 = 0
    cc = p_ref[0:1, d_dim + 1 + 2 * s:d_dim + 1 + 3 * s]       # (1, STATES), [0,0] = 0

    # Gaussian mixture soft assignments in (K, N) layout — one full (8,128) vreg.
    # Softmax over k is invariant to the per-cell ||x_n||^2 term, so the
    # effective logits are mu @ x^T - 0.5||mu||^2.
    logits = lax.dot_general(mu, x, (((1,), (1,)), ((), ())),
                             preferred_element_type=jnp.float32) + nm2   # (K, N)
    lmax = jnp.max(logits, axis=0, keepdims=True)              # (1, N) sublane reduce
    e = jnp.exp(logits - lmax)                                 # (K, N) one EUP pass
    denom = jnp.sum(e, axis=0, keepdims=True)                  # (1, N)
    p = e * pl.reciprocal(denom, approx=True)                  # EUP vrcp

    # d == mixture(x), as a (K, 1) column: mean over cells (single lane reduce).
    dvec = jnp.sum(p, axis=1, keepdims=True) * (1.0 / n)       # (K, 1)

    # Degree-2 polynomial per state: sum_k d*(a1 + a2*d) + c.  Column 0 has
    # all-zero coefficients, reproducing PolynomialLayer's zeros column.
    out_ref[...] = jnp.sum(dvec * (a1 + a2 * dvec), axis=0, keepdims=True) + cc


def density_classifier(x, mu, a, c):
    """x: (N, D) cells; mu: (K, D) mixture means; a: (STATES-1, DEGREE, K); c: (STATES-1,)."""
    k_centers = mu.shape[0]
    mu32 = jnp.asarray(mu, jnp.float32)                              # (K, D)
    nm2 = -0.5 * jnp.sum(mu32 * mu32, axis=-1, keepdims=True)        # (K, 1)
    zcol = jnp.zeros((k_centers, 1), jnp.float32)
    a1_full = jnp.concatenate([zcol, a[:, 0, :].astype(jnp.float32).T], axis=1)  # (K, STATES)
    a2_full = jnp.concatenate([zcol, a[:, 1, :].astype(jnp.float32).T], axis=1)  # (K, STATES)
    c_row = jnp.concatenate([jnp.zeros((1,), jnp.float32),
                             jnp.asarray(c, jnp.float32)])                       # (STATES,)
    c_full = jnp.zeros((k_centers, STATES), jnp.float32).at[0, :].set(c_row)     # (K, STATES)
    params = jnp.concatenate([mu32, nm2, a1_full, a2_full, c_full], axis=1)      # (K, D+1+3S)

    return pl.pallas_call(
        _density_classifier_kernel,
        out_shape=jax.ShapeDtypeStruct((1, STATES), jnp.float32),
        in_specs=[
            pl.BlockSpec(memory_space=pltpu.MemorySpace.VMEM),   # x, whole array
            pl.BlockSpec(memory_space=pltpu.MemorySpace.VMEM),   # packed params
        ],
        out_specs=pl.BlockSpec(memory_space=pltpu.MemorySpace.VMEM),
    )(jnp.asarray(x, jnp.float32), params)


def reference(x, mu, a, c):
    """Pure-JAX reference matching the PyTorch forward semantics."""
    logits = -0.5 * jnp.sum((x[:, None, :] - mu[None, :, :]) ** 2, axis=-1)
    p = jax.nn.softmax(logits, axis=-1)
    d = jnp.mean(p, axis=0, keepdims=True)                       # (1, K)
    outs = [jnp.zeros((d.shape[0], 1), jnp.float32)]
    for s in range(STATES - 1):
        val = jnp.sum(a[s, 0, :] * d + a[s, 1, :] * d ** 2, axis=1) + c[s]
        outs.append(val[:, None])
    return jnp.concatenate(outs, axis=1)                         # (1, STATES)


if __name__ == "__main__":
    key = jax.random.PRNGKey(0)
    kx, kmu, ka, kc = jax.random.split(key, 4)

    x = jax.random.normal(kx, (N, D), dtype=jnp.float32)
    mu = jax.random.normal(kmu, (K, D), dtype=jnp.float32)
    # Polynomial params: torch init is zeros; use deterministic nonzero values
    # so the computation is exercised (shapes match the module __init__).
    a = 0.1 * jax.random.normal(ka, (STATES - 1, DEGREE, K), dtype=jnp.float32)
    c = 0.1 * jax.random.normal(kc, (STATES - 1,), dtype=jnp.float32)

    out = density_classifier(x, mu, a, c)
    out = jax.block_until_ready(out)

    ref = reference(x, mu, a, c)
    np.testing.assert_allclose(np.asarray(out), np.asarray(ref),
                               rtol=1e-4, atol=1e-5)
    assert out.shape == (1, STATES)
    print("KERNEL_OK")
</pallas_src>

<mosaic_0001>
module attributes {stable_mosaic.version = 11 : i64} {
  func.func @_density_classifier_kernel(%arg0: memref<128x32xf32, #tpu.memory_space<vmem>>, %arg1: memref<8x39xf32, #tpu.memory_space<vmem>>, %arg2: memref<1x2xf32, #tpu.memory_space<vmem>>) attributes {dimension_semantics = [], scalar_prefetch = 0 : i64, scratch_operands = 0 : i64, tpu.core_type = #tpu.core_type<tc>} {
    %c0 = arith.constant 0 : index
    %c0_0 = arith.constant 0 : index
    %0 = vector.load %arg0[%c0, %c0_0] : memref<128x32xf32, #tpu.memory_space<vmem>>, vector<128x32xf32>
    %c0_1 = arith.constant 0 : index
    %c0_2 = arith.constant 0 : index
    %1 = vector.load %arg1[%c0_1, %c0_2] : memref<8x39xf32, #tpu.memory_space<vmem>>, vector<8x32xf32>
    %c0_3 = arith.constant 0 : index
    %c32 = arith.constant 32 : index
    %2 = vector.load %arg1[%c0_3, %c32] : memref<8x39xf32, #tpu.memory_space<vmem>>, vector<8x1xf32>
    %c0_4 = arith.constant 0 : index
    %c33 = arith.constant 33 : index
    %3 = vector.load %arg1[%c0_4, %c33] : memref<8x39xf32, #tpu.memory_space<vmem>>, vector<8x2xf32>
    %c0_5 = arith.constant 0 : index
    %c35 = arith.constant 35 : index
    %4 = vector.load %arg1[%c0_5, %c35] : memref<8x39xf32, #tpu.memory_space<vmem>>, vector<8x2xf32>
    %c0_6 = arith.constant 0 : index
    %c37 = arith.constant 37 : index
    %5 = vector.load %arg1[%c0_6, %c37] : memref<8x39xf32, #tpu.memory_space<vmem>>, vector<1x2xf32>
    %cst = arith.constant dense<0.000000e+00> : vector<8x128xf32>
    %6 = tpu.matmul %1, %0, %cst {dimension_numbers = #tpu.dot_dimension_numbers<[1], [1], [0], [0], [0, 0, 1, 0], [], []>} : vector<8x32xf32>, vector<128x32xf32>, vector<8x128xf32> -> vector<8x128xf32>
    %7 = vector.broadcast %2 : vector<8x1xf32> to vector<8x128xf32>
    %8 = arith.addf %6, %7 : vector<8x128xf32>
    %cst_7 = arith.constant dense<0xFF800000> : vector<128xf32>
    %9 = vector.multi_reduction <maximumf>, %8, %cst_7 [0] : vector<8x128xf32> to vector<128xf32>
    %10 = vector.shape_cast %9 : vector<128xf32> to vector<1x128xf32>
    %11 = vector.broadcast %10 : vector<1x128xf32> to vector<8x128xf32>
    %12 = arith.subf %8, %11 : vector<8x128xf32>
    %13 = math.exp %12 : vector<8x128xf32>
    %cst_8 = arith.constant dense<0.000000e+00> : vector<128xf32>
    %14 = vector.multi_reduction <add>, %13, %cst_8 [0] : vector<8x128xf32> to vector<128xf32>
    %15 = vector.shape_cast %14 : vector<128xf32> to vector<1x128xf32>
    %16 = tpu.reciprocal %15 {approx = true} : vector<1x128xf32> -> vector<1x128xf32>
    %17 = vector.broadcast %16 : vector<1x128xf32> to vector<8x128xf32>
    %18 = arith.mulf %13, %17 : vector<8x128xf32>
    %cst_9 = arith.constant dense<0.000000e+00> : vector<8xf32>
    %19 = vector.multi_reduction <add>, %18, %cst_9 [1] : vector<8x128xf32> to vector<8xf32>
    %20 = vector.shape_cast %19 : vector<8xf32> to vector<8x1xf32>
    %cst_10 = arith.constant 7.812500e-03 : f32
    %21 = vector.broadcast %cst_10 : f32 to vector<8x1xf32>
    %22 = arith.mulf %20, %21 : vector<8x1xf32>
    %23 = vector.broadcast %22 : vector<8x1xf32> to vector<8x2xf32>
    %24 = arith.mulf %4, %23 : vector<8x2xf32>
    %25 = arith.addf %3, %24 : vector<8x2xf32>
    %26 = vector.broadcast %22 : vector<8x1xf32> to vector<8x2xf32>
    %27 = arith.mulf %26, %25 : vector<8x2xf32>
    %cst_11 = arith.constant dense<0.000000e+00> : vector<2xf32>
    %28 = vector.multi_reduction <add>, %27, %cst_11 [0] : vector<8x2xf32> to vector<2xf32>
    %29 = vector.shape_cast %28 : vector<2xf32> to vector<1x2xf32>
    %30 = arith.addf %29, %5 : vector<1x2xf32>
    %c0_12 = arith.constant 0 : index
    %c0_13 = arith.constant 0 : index
    %31 = vector.load %arg2[%c0_12, %c0_13] : memref<1x2xf32, #tpu.memory_space<vmem>>, vector<1x2xf32>
    tpu.vector_store %arg2[%c0_12, %c0_13], %30 {strides = array<i32>} : memref<1x2xf32, #tpu.memory_space<vmem>>, vector<1x2xf32>,
    return
  }
}

</mosaic_0001>

<llo_original>
// kernel: tpu_custom_call.1
$region0: #{tpu_custom_call.1}
  #allocation0 [shape = 'u32[]', space=smem, size = 0x4, offset = 0x4, fixed_abs, tag = 'smem constant byte address 0x4 - core index']
  #allocation1 [shape = 'u32[72,128]{1,0:T(1,128)}', space=vmem, size = 0x9000, scoped, tag = 'internal scratch']
  %s0 = inlined_call_operand.vmem [shape: f32[128,32], index: 0, kind: input, shape index: {}]
  %s1 = inlined_call_operand.vmem [shape: f32[8,39], index: 1, kind: input, shape index: {}]
  %s2 = inlined_call_operand.hbm [shape: f32[1,2], index: 2, kind: output, shape index: {}]
  %s3 = sld [smem:[#allocation0]]
  $region18: #{tpu_custom_call.1} parent=0
    _
  %s5 = ssub.s32 1, %s3
  %s6 = scalar_select 0, %s5, %s3
  $region1: #{tpu_custom_call.1} parent=0
    #allocation2 [shape = 'u8[512]{0}', space=vmem, size = 0x400, scoped, tag = 'output window, operand 0, single buffered']
    #allocation3 [shape = 's32[1]{0}', space=sflag, size = 0x4, scoped, tag = 'scoped memory for tpu_custom_call.1']
    %7 = vsyncpa [#allocation3], 0
    // Predicated region
    $region2: #{tpu_custom_call.1} parent=1 // pred_check
      _
    $region3: #{tpu_custom_call.1} parent=1 // pred_check_branch
      %9 = sbr.rel (0) target = $region5
    $region4: #{tpu_custom_call.1} parent=1 // pred_region
      _
    $region5: #{tpu_custom_call.1} parent=1 // pred_fallthru
      _
    // Predicated region
    $region6: #{tpu_custom_call.1} parent=1 // pred_check
      _
    $region7: #{tpu_custom_call.1} parent=1 // pred_check_branch
      %11 = sbr.rel (0) target = $region9
    $region8: #{tpu_custom_call.1} parent=1 // pred_region
      _
    $region9: #{tpu_custom_call.1} parent=1 // pred_fallthru
      _
    %v12 = vld [vmem:[%s0] sm:$0xff]
    %v13 = vld [vmem:[%s0 + $0x8] sm:$0xff]
    %v14 = vld [vmem:[%s0 + $0x10] sm:$0xff]
    %v15 = vld [vmem:[%s0 + $0x18] sm:$0xff]
    %v16 = vld [vmem:[%s0 + $0x20] sm:$0xff]
    %v17 = vld [vmem:[%s0 + $0x28] sm:$0xff]
    %v18 = vld [vmem:[%s0 + $0x30] sm:$0xff]
    %v19 = vld [vmem:[%s0 + $0x38] sm:$0xff]
    %v20 = vld [vmem:[%s0 + $0x40] sm:$0xff]
    %v21 = vld [vmem:[%s0 + $0x48] sm:$0xff]
    %v22 = vld [vmem:[%s0 + $0x50] sm:$0xff]
    %v23 = vld [vmem:[%s0 + $0x58] sm:$0xff]
    %v24 = vld [vmem:[%s0 + $0x60] sm:$0xff]
    %v25 = vld [vmem:[%s0 + $0x68] sm:$0xff]
    %v26 = vld [vmem:[%s0 + $0x70] sm:$0xff]
    %v27 = vld [vmem:[%s0 + $0x78] sm:$0xff]
    %v28 = vld [vmem:[%s1] sm:$0xff]
    %v29 = vld [vmem:[%s1] sm:$0x1]
    %31 = vset.pattern.permute.xlu0 32
    %32 = vperm.xlu0 %31, %v28
    %v33 = vpop.permute.xlu0 %32
    %vm35 = vcmask 261120
    %v36 = vsel %vm35, %v28, 0
    %v39 = vsel %vm35, %v12, 0
    %v42 = vsel %vm35, %v13, 0
    %v45 = vsel %vm35, %v14, 0
    %v48 = vsel %vm35, %v15, 0
    %v51 = vsel %vm35, %v16, 0
    %v54 = vsel %vm35, %v17, 0
    %v57 = vsel %vm35, %v18, 0
    %v60 = vsel %vm35, %v19, 0
    %v63 = vsel %vm35, %v20, 0
    %v66 = vsel %vm35, %v21, 0
    %v69 = vsel %vm35, %v22, 0
    %v72 = vsel %vm35, %v23, 0
    %v75 = vsel %vm35, %v24, 0
    %v78 = vsel %vm35, %v25, 0
    %v81 = vsel %vm35, %v26, 0
    %v84 = vsel %vm35, %v27, 0
    %86 = vmatpush.xpose.msra.mxu0 %v84
    %87 = vmatpush.xpose.msra.mxu0 %v81
    %88 = vmatpush.xpose.msra.mxu0 %v78
    %89 = vmatpush.xpose.msra.mxu0 %v75
    %90 = vmatpush.xpose.msra.mxu0 %v72
    %91 = vmatpush.xpose.msra.mxu0 %v69
    %92 = vmatpush.xpose.msra.mxu0 %v66
    %93 = vmatpush.xpose.msra.mxu0 %v63
    %94 = vmatpush.xpose.msra.mxu0 %v60
    %95 = vmatpush.xpose.msra.mxu0 %v57
    %96 = vmatpush.xpose.msra.mxu0 %v54
    %97 = vmatpush.xpose.msra.mxu0 %v51
    %98 = vmatpush.xpose.msra.mxu0 %v48
    %99 = vmatpush.xpose.msra.mxu0 %v45
    %100 = vmatpush.xpose.msra.mxu0 %v42
    %101 = vmatpush.xpose.msra.mxu0 %v39
    %102 = vmatmul.f32.gmra.mxu0 %v36
    %v103 = vpop.f32.mrf.mxu0
    %v104 = vadd.f32 %v33, %v103
    %105 = vdwg.mxu0
    %v106 = vrot.slane %v104, 4
    %v107 = vmax.f32 %v104, %v106
    %v108 = vrot.slane %v107, 2
    %v109 = vmax.f32 %v107, %v108
    %v110 = vrot.slane %v109, 1
    %v111 = vmax.f32 %v109, %v110
    %v112 = vsub.f32 %v104, %v111
    %v113 = vmul.f32 %v112, 1.442695
    %v114 = vpow.pop %v113
    %v115 = vrot.slane %v114, 4
    %v116 = vadd.f32 %v114, %v115
    %v117 = vrot.slane %v116, 2
    %v118 = vadd.f32 %v116, %v117
    %v119 = vrot.slane %v118, 1
    %v120 = vadd.f32 %v118, %v119
    %v121 = vrcp.pop %v120
    %v122 = vmul.f32 %v114, %v121
    %123 = vadd.xlane.f32.xlu0 %v122
    %v124 = vpop.xlane.xlu0 %123
    %v125 = vmul.f32 %v124, 0.0078125
    %v126 = vmul.f32 %v28, %v125
    %128 = vrot.lane.b32.xlu0 %v126, 126
    %v129 = vpop.permute.xlu0 %128
    %v131 = vadd.f32 %v28, %v129
    %v132 = vmul.f32 %v125, %v131
    %vm133 = vcmask 285960
    %v134 = vsel %vm133, %v132, 0.0
    %v135 = vrot.slane %v134, 4
    %v136 = vadd.f32 %v134, %v135
    %v137 = vrot.slane %v136, 2
    %v138 = vadd.f32 %v136, %v137
    %v139 = vrot.slane %v138, 1
    %v140 = vadd.f32 %v138, %v139
    %142 = vrot.lane.b32.xlu0 %v29, 124
    %v143 = vpop.permute.xlu0 %142
    %v145 = vadd.f32 %v140, %v143
    %147 = vrot.lane.b32.xlu0 %v145, 95
    %v148 = vpop.permute.xlu0 %147
    %vm150 = vcmask 8192
    %151 = vst.msk [vmem:[#allocation2] sm:$0x1] %vm150, %v148
    // Predicated region
    $region10: #{tpu_custom_call.1} parent=1 // pred_check
      _
    $region11: #{tpu_custom_call.1} parent=1 // pred_check_branch
      %153 = sbr.rel (0) target = $region13
    $region12: #{tpu_custom_call.1} parent=1 // pred_region
      %155 = vsyncadd [#allocation3], 0
      %s157 = sshll.u32 [#allocation2], 4
      %s158 = int_to_ptr.vmem [resolvable:$true] %s157
      %s159 = sshll.u32 %s2, 4
      %s160 = int_to_ptr.hbm [resolvable:$true] %s159
      %162 = dma.vmem_to_hbm [thread:$0]  %s158, 16, %s160, [#allocation3]
    $region13: #{tpu_custom_call.1} parent=1 // pred_fallthru
      _
    // Predicated region
    $region14: #{tpu_custom_call.1} parent=1 // pred_check
      _
    $region15: #{tpu_custom_call.1} parent=1 // pred_check_branch
      %164 = sbr.rel (0) target = $region17
    $region16: #{tpu_custom_call.1} parent=1 // pred_region
      %166 = dma.done [#allocation3], 16
    $region17: #{tpu_custom_call.1} parent=1 // pred_fallthru
      _
    %167 = vsyncpa [#allocation3], 1

</llo_original>
